<compile_context>
chip_gen: v7x
topology: tpu7x:2x2x1
jax: 0.10.0
libtpu: 0.0.40
codegen_flags: <defaults>
</compile_context>

<pallas_src>
import functools

import jax
import jax.numpy as jnp
from jax.experimental import pallas as pl
from jax.experimental.pallas import tpu as pltpu


def se_block_kernel(x_ref, w1_ref, b1_ref, w2_ref, b2_ref, o_ref, *, inv_hw):
    # ---- squeeze: AdaptiveAvgPool2d(1) == mean over spatial (f32 accumulate)
    s = jnp.sum(x_ref[...].astype(jnp.float32), axis=-1) * inv_hw            # (B, C)

    # ---- excitation on the VPU (tiny rows -> keep the MXU out of it)
    # conv1: w1 is (Cr, C):  h[b, r] = sum_c s[b, c] * w1[r, c]
    w1 = w1_ref[...].astype(jnp.float32)
    b1 = b1_ref[...].astype(jnp.float32)
    h = jnp.sum(s[:, None, :] * w1[None, :, :], axis=-1) + b1                # (B, Cr)
    h = jnp.maximum(h, 0.0)
    # conv2: w2 is (C, Cr):  z[b, c] = sum_r h[b, r] * w2[c, r]
    w2 = w2_ref[...].astype(jnp.float32)
    b2 = b2_ref[...].astype(jnp.float32)
    z = jnp.sum(h[:, None, :] * w2[None, :, :], axis=-1) + b2                # (B, C)
    gate = jax.nn.sigmoid(z)                                                 # (B, C)

    # ---- re-scale: re-read x_ref (short live range; streams under stores)
    o_ref[...] = (x_ref[...].astype(jnp.float32) * gate[:, :, None]).astype(o_ref.dtype)


def _pick_batch_block(n, bytes_per_image, target_bytes):
    """Largest B with B*bytes_per_image <= target_bytes, preferring >= 4 grid
    steps and an even step count (so both v7x TensorCores get equal work)."""
    max_b = max(1, min(n, target_bytes // max(1, bytes_per_image)))

    def steps(b):
        return -(-n // b)

    # Preference order: (min_steps, require_even)
    for min_steps, want_even in ((4, True), (4, False), (2, True), (2, False), (1, False)):
        for b in range(max_b, 0, -1):
            st = steps(b)
            if st >= min_steps and (not want_even or st % 2 == 0):
                return b
    return 1


def se_block(x, w1, b1, w2, b2, *, target_block_bytes=None):
    """SEBlock forward.

    x : (N, C, H, W)
    w1: (Cr, C)  == conv1.weight[:, :, 0, 0]
    b1: (1, Cr)  == conv1.bias[None, :]
    w2: (C, Cr)  == conv2.weight[:, :, 0, 0]
    b2: (1, C)   == conv2.bias[None, :]
    """
    N, C, H, W = x.shape
    Cr = w1.shape[0]
    HW = H * W

    # No pad / slice: keep the true spatial extent; block last dims equal the
    # full array dims so Mosaic emits (masked, if ragged) partial vregs only.
    x_flat = x.reshape(N, C, HW)

    # Generation-aware VMEM budget (v7x has 64 MiB/TC; v5e/v6e have 128 MiB).
    try:
        vmem_cap = int(pltpu.get_tpu_info().vmem_capacity_bytes)
    except Exception:
        vmem_cap = 64 << 20  # conservative fallback (covers v7x)

    if target_block_bytes is None:
        # ~8-12 MiB blocks: big enough to amortize the ~0.35us/step overhead,
        # small enough that 2x(in)+2x(out) double buffering fits comfortably.
        target_block_bytes = min(12 << 20, max(1 << 20, vmem_cap // 8))

    bytes_per_image = C * HW * x.dtype.itemsize
    B = _pick_batch_block(N, bytes_per_image, target_block_bytes)
    grid = (pl.cdiv(N, B),)

    block_bytes = B * bytes_per_image
    # double-buffered input block + double-buffered output block + weights/margin,
    # clamped against the chip's physical VMEM with headroom.
    vmem_limit = max(4 * block_bytes + (2 << 20), 16 << 20)
    vmem_limit = int(min(vmem_limit, int(vmem_cap * 0.85)))

    kernel = functools.partial(se_block_kernel, inv_hw=1.0 / HW)

    out = pl.pallas_call(
        kernel,
        out_shape=jax.ShapeDtypeStruct((N, C, HW), x.dtype),
        grid_spec=pltpu.PrefetchScalarGridSpec(
            num_scalar_prefetch=0,
            grid=grid,
            in_specs=[
                pl.BlockSpec((B, C, HW), lambda n: (n, 0, 0)),
                pl.BlockSpec((Cr, C), lambda n: (0, 0)),
                pl.BlockSpec((1, Cr), lambda n: (0, 0)),
                pl.BlockSpec((C, Cr), lambda n: (0, 0)),
                pl.BlockSpec((1, C), lambda n: (0, 0)),
            ],
            out_specs=pl.BlockSpec((B, C, HW), lambda n: (n, 0, 0)),
        ),
        compiler_params=pltpu.CompilerParams(
            dimension_semantics=("parallel",),
            vmem_limit_bytes=vmem_limit,
        ),
    )(x_flat, w1, b1, w2, b2)

    return out.reshape(N, C, H, W)


def se_block_reference(x, w1, b1, w2, b2):
    """Pure-JAX reference matching the PyTorch forward."""
    s = jnp.mean(x.astype(jnp.float32), axis=(2, 3))                 # (N, C)
    h = jnp.maximum(s @ w1.astype(jnp.float32).T + b1, 0.0)          # (N, Cr)
    g = jax.nn.sigmoid(h @ w2.astype(jnp.float32).T + b2)            # (N, C)
    return (x.astype(jnp.float32) * g[:, :, None, None]).astype(x.dtype)


if __name__ == "__main__":
    # Shapes consistent with SEBlock(channel=32, reduction=16)
    N, C, H, W = 2, 32, 16, 16
    reduction = 16
    Cr = C // reduction

    key = jax.random.PRNGKey(0)
    kx, k1, kb1, k2, kb2 = jax.random.split(key, 5)

    x = jax.random.normal(kx, (N, C, H, W), dtype=jnp.float32)

    # Conv2d 1x1 weights stored exactly as conv.weight[:, :, 0, 0]:
    #   w1: (Cr, C), w2: (C, Cr); biases broadcast as (1, Cr)/(1, C).
    w1 = 0.1 * jax.random.normal(k1, (Cr, C), dtype=jnp.float32)
    b1 = 0.1 * jax.random.normal(kb1, (1, Cr), dtype=jnp.float32)
    w2 = 0.1 * jax.random.normal(k2, (C, Cr), dtype=jnp.float32)
    b2 = 0.1 * jax.random.normal(kb2, (1, C), dtype=jnp.float32)

    y = se_block(x, w1, b1, w2, b2)
    y = jax.block_until_ready(y)

    y_ref = se_block_reference(x, w1, b1, w2, b2)
    assert y.shape == (N, C, H, W)
    assert jnp.allclose(y, y_ref, atol=1e-5, rtol=1e-5)

    print("KERNEL_OK")
</pallas_src>

<mosaic_0001>
module attributes {stable_mosaic.version = 11 : i64} {
  func.func @se_block_kernel(%arg0: i32, %arg1: memref<1x32x256xf32, #tpu.memory_space<vmem>>, %arg2: memref<2x32xf32, #tpu.memory_space<vmem>>, %arg3: memref<1x2xf32, #tpu.memory_space<vmem>>, %arg4: memref<32x2xf32, #tpu.memory_space<vmem>>, %arg5: memref<1x32xf32, #tpu.memory_space<vmem>>, %arg6: memref<1x32x256xf32, #tpu.memory_space<vmem>>) attributes {dimension_semantics = [#tpu.dimension_semantics<parallel>], iteration_bounds = array<i64: 2>, scalar_prefetch = 0 : i64, scratch_operands = 0 : i64, tpu.core_type = #tpu.core_type<tc>, window_params = [{transform_indices = @transform_0, window_bounds = array<i64: 1, 32, 256>}, {pipeline_mode = #tpu.pipeline_mode<synchronous>, transform_indices = @transform_1, window_bounds = array<i64: 2, 32>}, {pipeline_mode = #tpu.pipeline_mode<synchronous>, transform_indices = @transform_2, window_bounds = array<i64: 1, 2>}, {pipeline_mode = #tpu.pipeline_mode<synchronous>, transform_indices = @transform_3, window_bounds = array<i64: 32, 2>}, {pipeline_mode = #tpu.pipeline_mode<synchronous>, transform_indices = @transform_4, window_bounds = array<i64: 1, 32>}, {transform_indices = @transform_5, window_bounds = array<i64: 1, 32, 256>}]} {
    %c0 = arith.constant 0 : index
    %c0_0 = arith.constant 0 : index
    %c0_1 = arith.constant 0 : index
    %0 = vector.load %arg1[%c0, %c0_0, %c0_1] : memref<1x32x256xf32, #tpu.memory_space<vmem>>, vector<1x32x256xf32>
    %cst = arith.constant dense<0.000000e+00> : vector<1x32xf32>
    %1 = vector.multi_reduction <add>, %0, %cst [2] : vector<1x32x256xf32> to vector<1x32xf32>
    %cst_2 = arith.constant 3.906250e-03 : f32
    %2 = vector.broadcast %cst_2 : f32 to vector<1x32xf32>
    %3 = arith.mulf %1, %2 : vector<1x32xf32>
    %c0_3 = arith.constant 0 : index
    %c0_4 = arith.constant 0 : index
    %4 = vector.load %arg2[%c0_3, %c0_4] : memref<2x32xf32, #tpu.memory_space<vmem>>, vector<2x32xf32>
    %c0_5 = arith.constant 0 : index
    %c0_6 = arith.constant 0 : index
    %5 = vector.load %arg3[%c0_5, %c0_6] : memref<1x2xf32, #tpu.memory_space<vmem>>, vector<1x2xf32>
    %6 = vector.shape_cast %3 : vector<1x32xf32> to vector<1x1x32xf32>
    %7 = vector.shape_cast %4 : vector<2x32xf32> to vector<1x2x32xf32>
    %8 = vector.broadcast %6 : vector<1x1x32xf32> to vector<1x2x32xf32>
    %9 = arith.mulf %8, %7 : vector<1x2x32xf32>
    %cst_7 = arith.constant dense<0.000000e+00> : vector<1x2xf32>
    %10 = vector.multi_reduction <add>, %9, %cst_7 [2] : vector<1x2x32xf32> to vector<1x2xf32>
    %11 = arith.addf %10, %5 : vector<1x2xf32>
    %cst_8 = arith.constant 0.000000e+00 : f32
    %12 = vector.broadcast %cst_8 : f32 to vector<1x2xf32>
    %13 = arith.maximumf %11, %12 : vector<1x2xf32>
    %c0_9 = arith.constant 0 : index
    %c0_10 = arith.constant 0 : index
    %14 = vector.load %arg4[%c0_9, %c0_10] : memref<32x2xf32, #tpu.memory_space<vmem>>, vector<32x2xf32>
    %c0_11 = arith.constant 0 : index
    %c0_12 = arith.constant 0 : index
    %15 = vector.load %arg5[%c0_11, %c0_12] : memref<1x32xf32, #tpu.memory_space<vmem>>, vector<1x32xf32>
    %16 = vector.shape_cast %13 : vector<1x2xf32> to vector<1x1x2xf32>
    %17 = vector.shape_cast %14 : vector<32x2xf32> to vector<1x32x2xf32>
    %18 = vector.broadcast %16 : vector<1x1x2xf32> to vector<1x32x2xf32>
    %19 = arith.mulf %18, %17 : vector<1x32x2xf32>
    %cst_13 = arith.constant dense<0.000000e+00> : vector<1x32xf32>
    %20 = vector.multi_reduction <add>, %19, %cst_13 [2] : vector<1x32x2xf32> to vector<1x32xf32>
    %21 = arith.addf %20, %15 : vector<1x32xf32>
    %22 = arith.negf %21 : vector<1x32xf32>
    %23 = math.exp %22 : vector<1x32xf32>
    %cst_14 = arith.constant 1.000000e+00 : f32
    %24 = vector.broadcast %cst_14 : f32 to vector<1x32xf32>
    %25 = arith.addf %24, %23 : vector<1x32xf32>
    %26 = arith.divf %24, %25 : vector<1x32xf32>
    %c0_15 = arith.constant 0 : index
    %c0_16 = arith.constant 0 : index
    %c0_17 = arith.constant 0 : index
    %27 = vector.load %arg1[%c0_15, %c0_16, %c0_17] : memref<1x32x256xf32, #tpu.memory_space<vmem>>, vector<1x32x256xf32>
    %28 = vector.shape_cast %26 : vector<1x32xf32> to vector<1x32x1xf32>
    %29 = vector.broadcast %28 : vector<1x32x1xf32> to vector<1x32x256xf32>
    %30 = arith.mulf %27, %29 : vector<1x32x256xf32>
    %c0_18 = arith.constant 0 : index
    %c0_19 = arith.constant 0 : index
    %c0_20 = arith.constant 0 : index
    %31 = vector.load %arg6[%c0_18, %c0_19, %c0_20] : memref<1x32x256xf32, #tpu.memory_space<vmem>>, vector<1x32x256xf32>
    tpu.vector_store %arg6[%c0_18, %c0_19, %c0_20], %30 {strides = array<i32>} : memref<1x32x256xf32, #tpu.memory_space<vmem>>, vector<1x32x256xf32>,
    return
  }
  func.func @transform_0(%arg0: i32) -> (i32, i32, i32) {
    %c0_i32 = arith.constant 0 : i32
    %c0_i32_0 = arith.constant 0 : i32
    %c0_i32_1 = arith.constant 0 : i32
    return %arg0, %c0_i32, %c0_i32_0 : i32, i32, i32
  }
  func.func @transform_1(%arg0: i32) -> (i32, i32) {
    %c0_i32 = arith.constant 0 : i32
    %c0_i32_0 = arith.constant 0 : i32
    %c0_i32_1 = arith.constant 0 : i32
    return %c0_i32, %c0_i32_0 : i32, i32
  }
  func.func @transform_2(%arg0: i32) -> (i32, i32) {
    %c0_i32 = arith.constant 0 : i32
    %c0_i32_0 = arith.constant 0 : i32
    %c0_i32_1 = arith.constant 0 : i32
    return %c0_i32, %c0_i32_0 : i32, i32
  }
  func.func @transform_3(%arg0: i32) -> (i32, i32) {
    %c0_i32 = arith.constant 0 : i32
    %c0_i32_0 = arith.constant 0 : i32
    %c0_i32_1 = arith.constant 0 : i32
    return %c0_i32, %c0_i32_0 : i32, i32
  }
  func.func @transform_4(%arg0: i32) -> (i32, i32) {
    %c0_i32 = arith.constant 0 : i32
    %c0_i32_0 = arith.constant 0 : i32
    %c0_i32_1 = arith.constant 0 : i32
    return %c0_i32, %c0_i32_0 : i32, i32
  }
  func.func @transform_5(%arg0: i32) -> (i32, i32, i32) {
    %c0_i32 = arith.constant 0 : i32
    %c0_i32_0 = arith.constant 0 : i32
    %c0_i32_1 = arith.constant 0 : i32
    return %arg0, %c0_i32, %c0_i32_0 : i32, i32, i32
  }
}

</mosaic_0001>

<llo_original>
// kernel: tpu_custom_call.1
$region0: #{tpu_custom_call.1}
  #allocation0 [shape = 'u32[]', space=smem, size = 0x4, offset = 0x4, fixed_abs, tag = 'smem constant byte address 0x4 - core index']
  #allocation1 [shape = 'u32[144,128]{1,0:T(1,128)}', space=vmem, size = 0x12000, scoped, tag = 'internal scratch']
  %s0 = inlined_call_operand.hbm [shape: f32[2,32,256], index: 0, kind: input, shape index: {}]
  %s1 = inlined_call_operand.vmem [shape: f32[2,32], index: 1, kind: input, shape index: {}]
  %s2 = inlined_call_operand.vmem [shape: f32[1,2], index: 2, kind: input, shape index: {}]
  %s3 = inlined_call_operand.vmem [shape: f32[32,2], index: 3, kind: input, shape index: {}]
  %s4 = inlined_call_operand.vmem [shape: f32[1,32], index: 4, kind: input, shape index: {}]
  %s5 = inlined_call_operand.hbm [shape: f32[2,32,256], index: 5, kind: output, shape index: {}]
  %s6 = sld [smem:[#allocation0]]
  $region57: #{tpu_custom_call.1} parent=0
    _
  %s8 = ssub.s32 1, %s6
  %s9 = scalar_select 0, %s8, %s6
  $region1: #{tpu_custom_call.1} parent=0
    #allocation2 [shape = 'u8[65536]{0}', space=vmem, size = 0x10000, scoped, tag = 'input window, operand 0']
    #allocation3 [shape = 's32[2]{0}', space=sflag, size = 0x8, scoped, tag = 'scoped memory for tpu_custom_call.1']
    #allocation4 [shape = 's32[2]{0}', space=sflag, size = 0x8, scoped, tag = 'scoped memory for tpu_custom_call.1']
    #allocation5 [shape = 'u8[65536]{0}', space=vmem, size = 0x10000, scoped, tag = 'output window, operand 0']
    %10 = vsyncpa [#allocation3], 0
    %s11 = scalar_lea.sflag [#allocation3], 1
    %12 = vsyncpa %s11, 0
    %13 = vsyncpa [#allocation4], 0
    %s14 = scalar_lea.sflag [#allocation4], 1
    %15 = vsyncpa %s14, 0
    loop: start=0, step=1, limit=4
    $region2: #{tpu_custom_call.1} parent=1 // loop_pre_header
      _
    $region3: #{tpu_custom_call.1} parent=1 // loop_header
      %s17 = sphi 0, %s21
      %p18 = scmp.ge.s32.totalorder %s17, 4
      %s27 = sphi 0, %s29
      %s30 = sphi 0, %s27
      %s31 = sphi 0, %s30
      %s47 = sphi 0, %s31
      %s51 = sphi 0, %s51
      %s53 = sphi 0, %s51
      %s54 = sphi 0, %s53
      %s68 = sphi 0, %s54
      %s72 = sphi 0, %s72
      %s74 = sphi 0, %s72
      %s75 = sphi 0, %s74
      %s89 = sphi 0, %s75
      %s93 = sphi 0, %s93
      %s95 = sphi 0, %s93
      %s96 = sphi 0, %s95
      %s110 = sphi 0, %s96
      %s114 = sphi 0, %s114
      %s116 = sphi 0, %s114
      %s117 = sphi 0, %s116
      %s131 = sphi 0, %s117
      %s137 = sphi 0, %s139
      %s140 = sphi 0, %s137
      %s141 = sphi 0, %s140
      %s157 = sphi 0, %s141
    $region4: #{tpu_custom_call.1} parent=1 // loop_header_branch
      %20 = sbr.rel (%p18) target = $region8
    $region5: #{tpu_custom_call.1} parent=1 // loop_body
      %s22 = ssub.s32 %s17, 1
      %s23 = ssub.s32 %s17, 2
      %s24 = sadd.s32 %s17, 1
      %s25 = ssub.s32 %s17, %s24
      %p26 = scmp.eq.s32.totalorder %s25, 0
      %s28 = sadd.s32 %s27, 1
      %s29 = scalar_select %p26, %s27, %s28
      %p32 = pneg %p26
      %p33 = scmp.eq.s32.totalorder %s17, 1
      %p34 = por %p32, %p33
      %p35 = scmp.ne.s32.totalorder %s27, %s30
      %p36 = scmp.eq.s32.totalorder %s17, 0
      %p37 = por %p35, %p36
      %p38 = scmp.ne.s32.totalorder %s27, %s30
      %p39 = scmp.eq.s32.totalorder %s22, 1
      %p40 = por %p38, %p39
      %p41 = scmp.ne.s32.totalorder %s30, %s31
      %p42 = scmp.eq.s32.totalorder %s22, 0
      %p43 = por %p41, %p42
      %p44 = scmp.ne.s32.totalorder %s30, %s31
      %p45 = scmp.eq.s32.totalorder %s23, 1
      %p46 = por %p44, %p45
      %p48 = scmp.ne.s32.totalorder %s31, %s47
      %p49 = scmp.eq.s32.totalorder %s23, 0
      %p50 = por %p48, %p49
      %s52 = sadd.s32 %s51, 1
      %p55 = scmp.eq.s32.totalorder %s17, 1
      %p56 = scmp.ne.s32.totalorder %s51, %s53
      %p57 = scmp.eq.s32.totalorder %s17, 0
      %p58 = por %p56, %p57
      %p59 = scmp.ne.s32.totalorder %s51, %s53
      %p60 = scmp.eq.s32.totalorder %s22, 1
      %p61 = por %p59, %p60
      %p62 = scmp.ne.s32.totalorder %s53, %s54
      %p63 = scmp.eq.s32.totalorder %s22, 0
      %p64 = por %p62, %p63
      %p65 = scmp.ne.s32.totalorder %s53, %s54
      %p66 = scmp.eq.s32.totalorder %s23, 1
      %p67 = por %p65, %p66
      %p69 = scmp.ne.s32.totalorder %s54, %s68
      %p70 = scmp.eq.s32.totalorder %s23, 0
      %p71 = por %p69, %p70
      %s73 = sadd.s32 %s72, 1
      %p76 = scmp.eq.s32.totalorder %s17, 1
      %p77 = scmp.ne.s32.totalorder %s72, %s74
      %p78 = scmp.eq.s32.totalorder %s17, 0
      %p79 = por %p77, %p78
      %p80 = scmp.ne.s32.totalorder %s72, %s74
      %p81 = scmp.eq.s32.totalorder %s22, 1
      %p82 = por %p80, %p81
      %p83 = scmp.ne.s32.totalorder %s74, %s75
      %p84 = scmp.eq.s32.totalorder %s22, 0
      %p85 = por %p83, %p84
      %p86 = scmp.ne.s32.totalorder %s74, %s75
      %p87 = scmp.eq.s32.totalorder %s23, 1
      %p88 = por %p86, %p87
      %p90 = scmp.ne.s32.totalorder %s75, %s89
      %p91 = scmp.eq.s32.totalorder %s23, 0
      %p92 = por %p90, %p91
      %s94 = sadd.s32 %s93, 1
      %p97 = scmp.eq.s32.totalorder %s17, 1
      %p98 = scmp.ne.s32.totalorder %s93, %s95
      %p99 = scmp.eq.s32.totalorder %s17, 0
      %p100 = por %p98, %p99
      %p101 = scmp.ne.s32.totalorder %s93, %s95
      %p102 = scmp.eq.s32.totalorder %s22, 1
      %p103 = por %p101, %p102
      %p104 = scmp.ne.s32.totalorder %s95, %s96
      %p105 = scmp.eq.s32.totalorder %s22, 0
      %p106 = por %p104, %p105
      %p107 = scmp.ne.s32.totalorder %s95, %s96
      %p108 = scmp.eq.s32.totalorder %s23, 1
      %p109 = por %p107, %p108
      %p111 = scmp.ne.s32.totalorder %s96, %s110
      %p112 = scmp.eq.s32.totalorder %s23, 0
      %p113 = por %p111, %p112
      %s115 = sadd.s32 %s114, 1
      %p118 = scmp.eq.s32.totalorder %s17, 1
      %p119 = scmp.ne.s32.totalorder %s114, %s116
      %p120 = scmp.eq.s32.totalorder %s17, 0
      %p121 = por %p119, %p120
      %p122 = scmp.ne.s32.totalorder %s114, %s116
      %p123 = scmp.eq.s32.totalorder %s22, 1
      %p124 = por %p122, %p123
      %p125 = scmp.ne.s32.totalorder %s116, %s117
      %p126 = scmp.eq.s32.totalorder %s22, 0
      %p127 = por %p125, %p126
      %p128 = scmp.ne.s32.totalorder %s116, %s117
      %p129 = scmp.eq.s32.totalorder %s23, 1
      %p130 = por %p128, %p129
      %p132 = scmp.ne.s32.totalorder %s117, %s131
      %p133 = scmp.eq.s32.totalorder %s23, 0
      %p134 = por %p132, %p133
      %s135 = ssub.s32 %s17, %s24
      %p136 = scmp.eq.s32.totalorder %s135, 0
      %s138 = sadd.s32 %s137, 1
      %s139 = scalar_select %p136, %s137, %s138
      %p142 = pneg %p136
      %p143 = scmp.eq.s32.totalorder %s17, 1
      %p144 = por %p142, %p143
      %p145 = scmp.ne.s32.totalorder %s137, %s140
      %p146 = scmp.eq.s32.totalorder %s17, 0
      %p147 = por %p145, %p146
      %p148 = scmp.ne.s32.totalorder %s137, %s140
      %p149 = scmp.eq.s32.totalorder %s22, 1
      %p150 = por %p148, %p149
      %p151 = scmp.ne.s32.totalorder %s140, %s141
      %p152 = scmp.eq.s32.totalorder %s22, 0
      %p153 = por %p151, %p152
      %p154 = scmp.ne.s32.totalorder %s140, %s141
      %p155 = scmp.eq.s32.totalorder %s23, 1
      %p156 = por %p154, %p155
      %p158 = scmp.ne.s32.totalorder %s141, %s157
      %p159 = scmp.eq.s32.totalorder %s23, 0
      %p160 = por %p158, %p159
      %p161 = scmp.le.s32.totalorder 1, %s17
      %p162 = scmp.lt.s32.totalorder %s17, 3
      %p163 = pnand %p161, %p162
      %p164 = pneg %p163
      // Predicated region
      $region9: #{tpu_custom_call.1} parent=5 // pred_check
        _
      $region10: #{tpu_custom_call.1} parent=5 // pred_check_branch
        %166 = sbr.rel (%p163) target = $region12
      $region11: #{tpu_custom_call.1} parent=5 // pred_region
        %s167 = ssub.s32 %s17, 1
        // Predicated region
        $region13: #{tpu_custom_call.1} parent=11 // pred_check
          %p168 = pneg %p64
        $region14: #{tpu_custom_call.1} parent=11 // pred_check_branch
          %170 = sbr.rel (%p168) target = $region16
        $region15: #{tpu_custom_call.1} parent=11 // pred_region
          _
        $region16: #{tpu_custom_call.1} parent=11 // pred_fallthru
          _
        // Predicated region
        $region17: #{tpu_custom_call.1} parent=11 // pred_check
          %p171 = pneg %p85
        $region18: #{tpu_custom_call.1} parent=11 // pred_check_branch
          %173 = sbr.rel (%p171) target = $region20
        $region19: #{tpu_custom_call.1} parent=11 // pred_region
          _
        $region20: #{tpu_custom_call.1} parent=11 // pred_fallthru
          _
        // Predicated region
        $region21: #{tpu_custom_call.1} parent=11 // pred_check
          %p174 = pneg %p106
        $region22: #{tpu_custom_call.1} parent=11 // pred_check_branch
          %176 = sbr.rel (%p174) target = $region24
        $region23: #{tpu_custom_call.1} parent=11 // pred_region
          _
        $region24: #{tpu_custom_call.1} parent=11 // pred_fallthru
          _
        // Predicated region
        $region25: #{tpu_custom_call.1} parent=11 // pred_check
          %p177 = pneg %p127
        $region26: #{tpu_custom_call.1} parent=11 // pred_check_branch
          %179 = sbr.rel (%p177) target = $region28
        $region27: #{tpu_custom_call.1} parent=11 // pred_region
          _
        $region28: #{tpu_custom_call.1} parent=11 // pred_fallthru
          _
      $region12: #{tpu_custom_call.1} parent=5 // pred_fallthru
        _
      %p180 = scmp.lt.s32.totalorder %s17, 2
      // Predicated region
      $region29: #{tpu_custom_call.1} parent=5 // pred_check
        %p181 = pneg %p180
      $region30: #{tpu_custom_call.1} parent=5 // pred_check_branch
        %183 = sbr.rel (%p181) target = $region32
      $region31: #{tpu_custom_call.1} parent=5 // pred_region
        // Predicated region
        $region33: #{tpu_custom_call.1} parent=31 // pred_check
          %p184 = pneg %p37
        $region34: #{tpu_custom_call.1} parent=31 // pred_check_branch
          %186 = sbr.rel (%p184) target = $region36
        $region35: #{tpu_custom_call.1} parent=31 // pred_region
          %s187 = sand.u32 %s27, 1
          %s188 = scalar_lea.sflag [#allocation3], %s187
          %s189 = sand.u32 %s27, 1
          %s190 = smul.addr %s189, 64
          %s191 = scalar_lea.vmem [#allocation2], %s190
          %s193 = ssub.s32 1024, 1024
          %194 = vsyncadd %s188, %s193
          %s195 = smul.addr %s17, 8
          %s196 = smul.addr %s195, 128
          %s197 = scalar_lea.hbm %s0, %s196
          %s198 = sshll.u32 %s191, 4
          %s199 = int_to_ptr.vmem [resolvable:$true] %s198
          %204 = dma.hbm_to_vmem [thread:$0]  %s197, 1024, %s199, %s188, 256, 256, 16
        $region36: #{tpu_custom_call.1} parent=31 // pred_fallthru
          _
      $region32: #{tpu_custom_call.1} parent=5 // pred_fallthru
        _
      %p205 = scmp.le.s32.totalorder 1, %s17
      %p206 = scmp.lt.s32.totalorder %s17, 3
      %p207 = pnand %p205, %p206
      %p208 = pneg %p207
      // Predicated region
      $region37: #{tpu_custom_call.1} parent=5 // pred_check
        _
      $region38: #{tpu_custom_call.1} parent=5 // pred_check_branch
        %210 = sbr.rel (%p207) target = $region40
      $region39: #{tpu_custom_call.1} parent=5 // pred_region
        %s211 = ssub.s32 %s17, 1
        %s212 = sand.u32 %s30, 1
        %s213 = scalar_lea.sflag [#allocation3], %s212
        %s214 = sand.u32 %s30, 1
        %s215 = smul.addr %s214, 64
        %s216 = scalar_lea.vmem [#allocation2], %s215
        // Predicated region
        $region41: #{tpu_custom_call.1} parent=39 // pred_check
          %p217 = pneg %p43
        $region42: #{tpu_custom_call.1} parent=39 // pred_check_branch
          %219 = sbr.rel (%p217) target = $region44
        $region43: #{tpu_custom_call.1} parent=39 // pred_region
          %220 = dma.done %s213, 1024
        $region44: #{tpu_custom_call.1} parent=39 // pred_fallthru
          _
        %s221 = sand.u32 %s30, 1
        %s222 = scalar_lea.sflag [#allocation3], %s221
        %s223 = sand.u32 %s30, 1
        %s224 = smul.addr %s223, 64
        %s225 = scalar_lea.vmem [#allocation2], %s224
        %p226 = pneg %p43
        %p227 = pneg %p40
        %p228 = pneg %p64
        %p229 = pneg %p61
        %p230 = pneg %p85
        %p231 = pneg %p82
        %p232 = pneg %p106
        %p233 = pneg %p103
        %p234 = pneg %p127
        %p235 = pneg %p124
        %p236 = pneg %p153
        %p237 = pneg %p150
        %s238 = sand.u32 %s140, 1
        %s239 = scalar_lea.sflag [#allocation4], %s238
        %s240 = sand.u32 %s140, 1
        %s241 = smul.addr %s240, 64
        %s242 = scalar_lea.vmem [#allocation5], %s241
        %v243 = vld [vmem:[%s216] sm:$0xff]
        %v244 = vld [vmem:[%s216 + $0x8] sm:$0xff]
        %v245 = vld [vmem:[%s216 + $0x10] sm:$0xff]
        %v246 = vld [vmem:[%s216 + $0x18] sm:$0xff]
        %v247 = vld [vmem:[%s216 + $0x20] sm:$0xff]
        %v248 = vld [vmem:[%s216 + $0x28] sm:$0xff]
        %v249 = vld [vmem:[%s216 + $0x30] sm:$0xff]
        %v250 = vld [vmem:[%s216 + $0x38] sm:$0xff]
        %v251 = vadd.f32 %v243, %v244
        %252 = vadd.xlane.f32.xlu0 %v251
        %v253 = vpop.xlane.xlu0 %252
        %v254 = vadd.f32 %v245, %v246
        %255 = vadd.xlane.f32.xlu0 %v254
        %v256 = vpop.xlane.xlu0 %255
        %v257 = vadd.f32 %v247, %v248
        %258 = vadd.xlane.f32.xlu0 %v257
        %v259 = vpop.xlane.xlu0 %258
        %v260 = vadd.f32 %v249, %v250
        %261 = vadd.xlane.f32.xlu0 %v260
        %v262 = vpop.xlane.xlu0 %261
        %v263 = vmul.f32 %v253, 0.00390625
        %v264 = vmul.f32 %v256, 0.00390625
        %v265 = vmul.f32 %v259, 0.00390625
        %v266 = vmul.f32 %v262, 0.00390625
        %v267 = vld [vmem:[%s1] sm:$0x3]
        %v268 = vld [vmem:[%s2] sm:$0x1]
        %v270 = vlaneseq
        %v271 = vshrl.u32 %v270, 7
        %v272 = vsub.s32 0, %v271
        %v273 = vrot.slane %v267, %v272
        %275 = vbcast.lane.b32.xlu0 %v273, 256
        %v276 = vpop.permute.xlu0 %275
        %s278 = sor.u32 256, 8
        %279 = vbcast.lane.b32.xlu0 %v273, %s278
        %v280 = vpop.permute.xlu0 %279
        %s282 = sor.u32 256, 16
        %283 = vbcast.lane.b32.xlu0 %v273, %s282
        %v284 = vpop.permute.xlu0 %283
        %s286 = sor.u32 256, 24
        %287 = vbcast.lane.b32.xlu0 %v273, %s286
        %v288 = vpop.permute.xlu0 %287
        %v289 = vlaneseq
        %v290 = vshrl.u32 %v289, 7
        %v291 = vsub.s32 1, %v290
        %v292 = vrot.slane %v267, %v291
        %294 = vbcast.lane.b32.xlu0 %v292, 256
        %v295 = vpop.permute.xlu0 %294
        %s297 = sor.u32 256, 8
        %298 = vbcast.lane.b32.xlu0 %v292, %s297
        %v299 = vpop.permute.xlu0 %298
        %s301 = sor.u32 256, 16
        %302 = vbcast.lane.b32.xlu0 %v292, %s301
        %v303 = vpop.permute.xlu0 %302
        %s305 = sor.u32 256, 24
        %306 = vbcast.lane.b32.xlu0 %v292, %s305
        %v307 = vpop.permute.xlu0 %306
        %v316 = vmul.f32 %v263, %v276
        %v317 = vmul.f32 %v264, %v280
        %v318 = vmul.f32 %v265, %v284
        %v319 = vmul.f32 %v266, %v288
        %v320 = vmul.f32 %v263, %v295
        %v321 = vmul.f32 %v264, %v299
        %v322 = vmul.f32 %v265, %v303
        %v323 = vmul.f32 %v266, %v307
        %332 = vset.pattern.permute.xlu0 0
        %333 = vperm.xlu0 %332, %v316
        %v334 = vpop.permute.xlu0 %333
        %335 = vset.pattern.permute.xlu0 0
        %336 = vperm.xlu0 %335, %v317
        %v337 = vpop.permute.xlu0 %336
        %338 = vset.pattern.permute.xlu0 0
        %339 = vperm.xlu0 %338, %v318
        %v340 = vpop.permute.xlu0 %339
        %341 = vset.pattern.permute.xlu0 0
        %342 = vperm.xlu0 %341, %v319
        %v343 = vpop.permute.xlu0 %342
        %344 = vset.pattern.permute.xlu0 0
        %345 = vperm.xlu0 %344, %v320
        %v346 = vpop.permute.xlu0 %345
        %347 = vset.pattern.permute.xlu0 0
        %348 = vperm.xlu0 %347, %v321
        %v349 = vpop.permute.xlu0 %348
        %350 = vset.pattern.permute.xlu0 0
        %351 = vperm.xlu0 %350, %v322
        %v352 = vpop.permute.xlu0 %351
        %353 = vset.pattern.permute.xlu0 0
        %354 = vperm.xlu0 %353, %v323
        %v355 = vpop.permute.xlu0 %354
        %v356 = vlaneseq
        %v357 = vand.u32 %v356, 127
        %v358 = vlaneseq
        %v359 = vshrl.u32 %v358, 7
        %v360 = vsub.s32 %v357, %v359
        %v361 = vrot.slane %v334, %v360
        %v362 = vadd.s32 %v357, 4294967288
        %v363 = vlaneseq
        %v364 = vshrl.u32 %v363, 7
        %v365 = vsub.s32 %v362, %v364
        %v366 = vrot.slane %v337, %v365
        %vm367 = vcmask 130112
        %v368 = vsel %vm367, %v366, %v361
        %v369 = vadd.s32 %v357, 4294967280
        %v370 = vlaneseq
        %v371 = vshrl.u32 %v370, 7
        %v372 = vsub.s32 %v369, %v371
        %v373 = vrot.slane %v340, %v372
        %vm374 = vcmask 195712
        %v375 = vsel %vm374, %v373, %v368
        %v376 = vadd.s32 %v357, 4294967272
        %v377 = vlaneseq
        %v378 = vshrl.u32 %v377, 7
        %v379 = vsub.s32 %v376, %v378
        %v380 = vrot.slane %v343, %v379
        %vm381 = vcmask 261312
        %v382 = vsel %vm381, %v380, %v375
        %v383 = vlaneseq
        %v384 = vshrl.u32 %v383, 7
        %v385 = vsub.s32 %v357, %v384
        %v386 = vrot.slane %v346, %v385
        %v387 = vlaneseq
        %v388 = vshrl.u32 %v387, 7
        %v389 = vsub.s32 %v362, %v388
        %v390 = vrot.slane %v349, %v389
        %v391 = vsel %vm367, %v390, %v386
        %v392 = vlaneseq
        %v393 = vshrl.u32 %v392, 7
        %v394 = vsub.s32 %v369, %v393
        %v395 = vrot.slane %v352, %v394
        %v396 = vsel %vm374, %v395, %v391
        %v397 = vlaneseq
        %v398 = vshrl.u32 %v397, 7
        %v399 = vsub.s32 %v376, %v398
        %v400 = vrot.slane %v355, %v399
        %v401 = vsel %vm381, %v400, %v396
        %vm402 = vcmask 1041409
        %v403 = vsel %vm402, %v401, %v382
        %vm405 = vcmask 254976
        %v406 = vsel %vm405, %v403, 0.0
        %407 = vadd.xlane.f32.xlu0 %v406
        %v408 = vpop.xlane.xlu0 %407
        %v410 = vlaneseq
        %v411 = vshrl.u32 %v410, 7
        %v412 = vsub.s32 0, %v411
        %v413 = vrot.slane %v268, %v412
        %415 = vbcast.lane.b32.xlu0 %v413, 256
        %v416 = vpop.permute.xlu0 %415
        %v418 = vadd.f32 %v408, %v416
        %v419 = vmax.f32 %v418, 0.0
        %v420 = vld [vmem:[%s3] sm:$0xff]
        %v421 = vld [vmem:[%s3 + $0x8] sm:$0xff]
        %v422 = vld [vmem:[%s3 + $0x10] sm:$0xff]
        %v423 = vld [vmem:[%s3 + $0x18] sm:$0xff]
        %v424 = vld [vmem:[%s4] sm:$0x1]
        %v429 = vlaneseq
        %v430 = vshrl.u32 %v429, 7
        %v431 = vsub.s32 0, %v430
        %v432 = vrot.slane %v420, %v431
        %434 = vbcast.lane.b32.xlu0 %v432, 256
        %v435 = vpop.permute.xlu0 %434
        %v436 = vlaneseq
        %v437 = vshrl.u32 %v436, 7
        %v438 = vsub.s32 1, %v437
        %v439 = vrot.slane %v420, %v438
        %441 = vbcast.lane.b32.xlu0 %v439, 256
        %v442 = vpop.permute.xlu0 %441
        %v443 = vlaneseq
        %v444 = vshrl.u32 %v443, 7
        %v445 = vsub.s32 2, %v444
        %v446 = vrot.slane %v420, %v445
        %448 = vbcast.lane.b32.xlu0 %v446, 256
        %v449 = vpop.permute.xlu0 %448
        %v450 = vlaneseq
        %v451 = vshrl.u32 %v450, 7
        %v452 = vsub.s32 3, %v451
        %v453 = vrot.slane %v420, %v452
        %455 = vbcast.lane.b32.xlu0 %v453, 256
        %v456 = vpop.permute.xlu0 %455
        %v457 = vlaneseq
        %v458 = vshrl.u32 %v457, 7
        %v459 = vsub.s32 4, %v458
        %v460 = vrot.slane %v420, %v459
        %462 = vbcast.lane.b32.xlu0 %v460, 256
        %v463 = vpop.permute.xlu0 %462
        %v464 = vlaneseq
        %v465 = vshrl.u32 %v464, 7
        %v466 = vsub.s32 5, %v465
        %v467 = vrot.slane %v420, %v466
        %469 = vbcast.lane.b32.xlu0 %v467, 256
        %v470 = vpop.permute.xlu0 %469
        %v471 = vlaneseq
        %v472 = vshrl.u32 %v471, 7
        %v473 = vsub.s32 6, %v472
        %v474 = vrot.slane %v420, %v473
        %476 = vbcast.lane.b32.xlu0 %v474, 256
        %v477 = vpop.permute.xlu0 %476
        %v478 = vlaneseq
        %v479 = vshrl.u32 %v478, 7
        %v480 = vsub.s32 7, %v479
        %v481 = vrot.slane %v420, %v480
        %483 = vbcast.lane.b32.xlu0 %v481, 256
        %v484 = vpop.permute.xlu0 %483
        %v485 = vlaneseq
        %v486 = vshrl.u32 %v485, 7
        %v487 = vsub.s32 0, %v486
        %v488 = vrot.slane %v421, %v487
        %490 = vbcast.lane.b32.xlu0 %v488, 256
        %v491 = vpop.permute.xlu0 %490
        %v492 = vlaneseq
        %v493 = vshrl.u32 %v492, 7
        %v494 = vsub.s32 1, %v493
        %v495 = vrot.slane %v421, %v494
        %497 = vbcast.lane.b32.xlu0 %v495, 256
        %v498 = vpop.permute.xlu0 %497
        %v499 = vlaneseq
        %v500 = vshrl.u32 %v499, 7
        %v501 = vsub.s32 2, %v500
        %v502 = vrot.slane %v421, %v501
        %504 = vbcast.lane.b32.xlu0 %v502, 256
        %v505 = vpop.permute.xlu0 %504
        %v506 = vlaneseq
        %v507 = vshrl.u32 %v506, 7
        %v508 = vsub.s32 3, %v507
        %v509 = vrot.slane %v421, %v508
        %511 = vbcast.lane.b32.xlu0 %v509, 256
        %v512 = vpop.permute.xlu0 %511
        %v513 = vlaneseq
        %v514 = vshrl.u32 %v513, 7
        %v515 = vsub.s32 4, %v514
        %v516 = vrot.slane %v421, %v515
        %518 = vbcast.lane.b32.xlu0 %v516, 256
        %v519 = vpop.permute.xlu0 %518
        %v520 = vlaneseq
        %v521 = vshrl.u32 %v520, 7
        %v522 = vsub.s32 5, %v521
        %v523 = vrot.slane %v421, %v522
        %525 = vbcast.lane.b32.xlu0 %v523, 256
        %v526 = vpop.permute.xlu0 %525
        %v527 = vlaneseq
        %v528 = vshrl.u32 %v527, 7
        %v529 = vsub.s32 6, %v528
        %v530 = vrot.slane %v421, %v529
        %532 = vbcast.lane.b32.xlu0 %v530, 256
        %v533 = vpop.permute.xlu0 %532
        %v534 = vlaneseq
        %v535 = vshrl.u32 %v534, 7
        %v536 = vsub.s32 7, %v535
        %v537 = vrot.slane %v421, %v536
        %539 = vbcast.lane.b32.xlu0 %v537, 256
        %v540 = vpop.permute.xlu0 %539
        %v541 = vlaneseq
        %v542 = vshrl.u32 %v541, 7
        %v543 = vsub.s32 0, %v542
        %v544 = vrot.slane %v422, %v543
        %546 = vbcast.lane.b32.xlu0 %v544, 256
        %v547 = vpop.permute.xlu0 %546
        %v548 = vlaneseq
        %v549 = vshrl.u32 %v548, 7
        %v550 = vsub.s32 1, %v549
        %v551 = vrot.slane %v422, %v550
        %553 = vbcast.lane.b32.xlu0 %v551, 256
        %v554 = vpop.permute.xlu0 %553
        %v555 = vlaneseq
        %v556 = vshrl.u32 %v555, 7
        %v557 = vsub.s32 2, %v556
        %v558 = vrot.slane %v422, %v557
        %560 = vbcast.lane.b32.xlu0 %v558, 256
        %v561 = vpop.permute.xlu0 %560
        %v562 = vlaneseq
        %v563 = vshrl.u32 %v562, 7
        %v564 = vsub.s32 3, %v563
        %v565 = vrot.slane %v422, %v564
        %567 = vbcast.lane.b32.xlu0 %v565, 256
        %v568 = vpop.permute.xlu0 %567
        %v569 = vlaneseq
        %v570 = vshrl.u32 %v569, 7
        %v571 = vsub.s32 4, %v570
        %v572 = vrot.slane %v422, %v571
        %574 = vbcast.lane.b32.xlu0 %v572, 256
        %v575 = vpop.permute.xlu0 %574
        %v576 = vlaneseq
        %v577 = vshrl.u32 %v576, 7
        %v578 = vsub.s32 5, %v577
        %v579 = vrot.slane %v422, %v578
        %581 = vbcast.lane.b32.xlu0 %v579, 256
        %v582 = vpop.permute.xlu0 %581
        %v583 = vlaneseq
        %v584 = vshrl.u32 %v583, 7
        %v585 = vsub.s32 6, %v584
        %v586 = vrot.slane %v422, %v585
        %588 = vbcast.lane.b32.xlu0 %v586, 256
        %v589 = vpop.permute.xlu0 %588
        %v590 = vlaneseq
        %v591 = vshrl.u32 %v590, 7
        %v592 = vsub.s32 7, %v591
        %v593 = vrot.slane %v422, %v592
        %595 = vbcast.lane.b32.xlu0 %v593, 256
        %v596 = vpop.permute.xlu0 %595
        %v597 = vlaneseq
        %v598 = vshrl.u32 %v597, 7
        %v599 = vsub.s32 0, %v598
        %v600 = vrot.slane %v423, %v599
        %602 = vbcast.lane.b32.xlu0 %v600, 256
        %v603 = vpop.permute.xlu0 %602
        %v604 = vlaneseq
        %v605 = vshrl.u32 %v604, 7
        %v606 = vsub.s32 1, %v605
        %v607 = vrot.slane %v423, %v606
        %609 = vbcast.lane.b32.xlu0 %v607, 256
        %v610 = vpop.permute.xlu0 %609
        %v611 = vlaneseq
        %v612 = vshrl.u32 %v611, 7
        %v613 = vsub.s32 2, %v612
        %v614 = vrot.slane %v423, %v613
        %616 = vbcast.lane.b32.xlu0 %v614, 256
        %v617 = vpop.permute.xlu0 %616
        %v618 = vlaneseq
        %v619 = vshrl.u32 %v618, 7
        %v620 = vsub.s32 3, %v619
        %v621 = vrot.slane %v423, %v620
        %623 = vbcast.lane.b32.xlu0 %v621, 256
        %v624 = vpop.permute.xlu0 %623
        %v625 = vlaneseq
        %v626 = vshrl.u32 %v625, 7
        %v627 = vsub.s32 4, %v626
        %v628 = vrot.slane %v423, %v627
        %630 = vbcast.lane.b32.xlu0 %v628, 256
        %v631 = vpop.permute.xlu0 %630
        %v632 = vlaneseq
        %v633 = vshrl.u32 %v632, 7
        %v634 = vsub.s32 5, %v633
        %v635 = vrot.slane %v423, %v634
        %637 = vbcast.lane.b32.xlu0 %v635, 256
        %v638 = vpop.permute.xlu0 %637
        %v639 = vlaneseq
        %v640 = vshrl.u32 %v639, 7
        %v641 = vsub.s32 6, %v640
        %v642 = vrot.slane %v423, %v641
        %644 = vbcast.lane.b32.xlu0 %v642, 256
        %v645 = vpop.permute.xlu0 %644
        %v646 = vlaneseq
        %v647 = vshrl.u32 %v646, 7
        %v648 = vsub.s32 7, %v647
        %v649 = vrot.slane %v423, %v648
        %651 = vbcast.lane.b32.xlu0 %v649, 256
        %v652 = vpop.permute.xlu0 %651
        %v685 = vmul.f32 %v419, %v435
        %v686 = vmul.f32 %v419, %v442
        %v687 = vmul.f32 %v419, %v449
        %v688 = vmul.f32 %v419, %v456
        %v689 = vmul.f32 %v419, %v463
        %v690 = vmul.f32 %v419, %v470
        %v691 = vmul.f32 %v419, %v477
        %v692 = vmul.f32 %v419, %v484
        %v693 = vmul.f32 %v419, %v491
        %v694 = vmul.f32 %v419, %v498
        %v695 = vmul.f32 %v419, %v505
        %v696 = vmul.f32 %v419, %v512
        %v697 = vmul.f32 %v419, %v519
        %v698 = vmul.f32 %v419, %v526
        %v699 = vmul.f32 %v419, %v533
        %v700 = vmul.f32 %v419, %v540
        %v701 = vmul.f32 %v419, %v547
        %v702 = vmul.f32 %v419, %v554
        %v703 = vmul.f32 %v419, %v561
        %v704 = vmul.f32 %v419, %v568
        %v705 = vmul.f32 %v419, %v575
        %v706 = vmul.f32 %v419, %v582
        %v707 = vmul.f32 %v419, %v589
        %v708 = vmul.f32 %v419, %v596
        %v709 = vmul.f32 %v419, %v603
        %v710 = vmul.f32 %v419, %v610
        %v711 = vmul.f32 %v419, %v617
        %v712 = vmul.f32 %v419, %v624
        %v713 = vmul.f32 %v419, %v631
        %v714 = vmul.f32 %v419, %v638
        %v715 = vmul.f32 %v419, %v645
        %v716 = vmul.f32 %v419, %v652
        %749 = vset.pattern.permute.xlu0 0
        %750 = vperm.xlu0 %749, %v685
        %v751 = vpop.permute.xlu0 %750
        %752 = vset.pattern.permute.xlu0 0
        %753 = vperm.xlu0 %752, %v686
        %v754 = vpop.permute.xlu0 %753
        %755 = vset.pattern.permute.xlu0 0
        %756 = vperm.xlu0 %755, %v687
        %v757 = vpop.permute.xlu0 %756
        %758 = vset.pattern.permute.xlu0 0
        %759 = vperm.xlu0 %758, %v688
        %v760 = vpop.permute.xlu0 %759
        %761 = vset.pattern.permute.xlu0 0
        %762 = vperm.xlu0 %761, %v689
        %v763 = vpop.permute.xlu0 %762
        %764 = vset.pattern.permute.xlu0 0
        %765 = vperm.xlu0 %764, %v690
        %v766 = vpop.permute.xlu0 %765
        %767 = vset.pattern.permute.xlu0 0
        %768 = vperm.xlu0 %767, %v691
        %v769 = vpop.permute.xlu0 %768
        %770 = vset.pattern.permute.xlu0 0
        %771 = vperm.xlu0 %770, %v692
        %v772 = vpop.permute.xlu0 %771
        %773 = vset.pattern.permute.xlu0 0
        %774 = vperm.xlu0 %773, %v693
        %v775 = vpop.permute.xlu0 %774
        %776 = vset.pattern.permute.xlu0 0
        %777 = vperm.xlu0 %776, %v694
        %v778 = vpop.permute.xlu0 %777
        %779 = vset.pattern.permute.xlu0 0
        %780 = vperm.xlu0 %779, %v695
        %v781 = vpop.permute.xlu0 %780
        %782 = vset.pattern.permute.xlu0 0
        %783 = vperm.xlu0 %782, %v696
        %v784 = vpop.permute.xlu0 %783
        %785 = vset.pattern.permute.xlu0 0
        %786 = vperm.xlu0 %785, %v697
        %v787 = vpop.permute.xlu0 %786
        %788 = vset.pattern.permute.xlu0 0
        %789 = vperm.xlu0 %788, %v698
        %v790 = vpop.permute.xlu0 %789
        %791 = vset.pattern.permute.xlu0 0
        %792 = vperm.xlu0 %791, %v699
        %v793 = vpop.permute.xlu0 %792
        %794 = vset.pattern.permute.xlu0 0
        %795 = vperm.xlu0 %794, %v700
        %v796 = vpop.permute.xlu0 %795
        %797 = vset.pattern.permute.xlu0 0
        %798 = vperm.xlu0 %797, %v701
        %v799 = vpop.permute.xlu0 %798
        %800 = vset.pattern.permute.xlu0 0
        %801 = vperm.xlu0 %800, %v702
        %v802 = vpop.permute.xlu0 %801
        %803 = vset.pattern.permute.xlu0 0
        %804 = vperm.xlu0 %803, %v703
        %v805 = vpop.permute.xlu0 %804
        %806 = vset.pattern.permute.xlu0 0
        %807 = vperm.xlu0 %806, %v704
        %v808 = vpop.permute.xlu0 %807
        %809 = vset.pattern.permute.xlu0 0
        %810 = vperm.xlu0 %809, %v705
        %v811 = vpop.permute.xlu0 %810
        %812 = vset.pattern.permute.xlu0 0
        %813 = vperm.xlu0 %812, %v706
        %v814 = vpop.permute.xlu0 %813
        %815 = vset.pattern.permute.xlu0 0
        %816 = vperm.xlu0 %815, %v707
        %v817 = vpop.permute.xlu0 %816
        %818 = vset.pattern.permute.xlu0 0
        %819 = vperm.xlu0 %818, %v708
        %v820 = vpop.permute.xlu0 %819
        %821 = vset.pattern.permute.xlu0 0
        %822 = vperm.xlu0 %821, %v709
        %v823 = vpop.permute.xlu0 %822
        %824 = vset.pattern.permute.xlu0 0
        %825 = vperm.xlu0 %824, %v710
        %v826 = vpop.permute.xlu0 %825
        %827 = vset.pattern.permute.xlu0 0
        %828 = vperm.xlu0 %827, %v711
        %v829 = vpop.permute.xlu0 %828
        %830 = vset.pattern.permute.xlu0 0
        %831 = vperm.xlu0 %830, %v712
        %v832 = vpop.permute.xlu0 %831
        %833 = vset.pattern.permute.xlu0 0
        %834 = vperm.xlu0 %833, %v713
        %v835 = vpop.permute.xlu0 %834
        %836 = vset.pattern.permute.xlu0 0
        %837 = vperm.xlu0 %836, %v714
        %v838 = vpop.permute.xlu0 %837
        %839 = vset.pattern.permute.xlu0 0
        %840 = vperm.xlu0 %839, %v715
        %v841 = vpop.permute.xlu0 %840
        %842 = vset.pattern.permute.xlu0 0
        %843 = vperm.xlu0 %842, %v716
        %v844 = vpop.permute.xlu0 %843
        %v845 = vlaneseq
        %v846 = vshrl.u32 %v845, 7
        %v847 = vsub.s32 %v357, %v846
        %v848 = vrot.slane %v751, %v847
        %v849 = vlaneseq
        %v850 = vshrl.u32 %v849, 7
        %v851 = vsub.s32 %v357, %v850
        %v852 = vrot.slane %v754, %v851
        %v853 = vlaneseq
        %v854 = vshrl.u32 %v853, 7
        %v855 = vsub.s32 %v357, %v854
        %v856 = vrot.slane %v757, %v855
        %v857 = vlaneseq
        %v858 = vshrl.u32 %v857, 7
        %v859 = vsub.s32 %v357, %v858
        %v860 = vrot.slane %v760, %v859
        %v861 = vlaneseq
        %v862 = vshrl.u32 %v861, 7
        %v863 = vsub.s32 %v357, %v862
        %v864 = vrot.slane %v763, %v863
        %v865 = vlaneseq
        %v866 = vshrl.u32 %v865, 7
        %v867 = vsub.s32 %v357, %v866
        %v868 = vrot.slane %v766, %v867
        %v869 = vlaneseq
        %v870 = vshrl.u32 %v869, 7
        %v871 = vsub.s32 %v357, %v870
        %v872 = vrot.slane %v769, %v871
        %v873 = vlaneseq
        %v874 = vshrl.u32 %v873, 7
        %v875 = vsub.s32 %v357, %v874
        %v876 = vrot.slane %v772, %v875
        %v877 = vlaneseq
        %v878 = vshrl.u32 %v877, 7
        %v879 = vsub.s32 %v357, %v878
        %v880 = vrot.slane %v775, %v879
        %v881 = vlaneseq
        %v882 = vshrl.u32 %v881, 7
        %v883 = vsub.s32 %v357, %v882
        %v884 = vrot.slane %v778, %v883
        %v885 = vlaneseq
        %v886 = vshrl.u32 %v885, 7
        %v887 = vsub.s32 %v357, %v886
        %v888 = vrot.slane %v781, %v887
        %v889 = vlaneseq
        %v890 = vshrl.u32 %v889, 7
        %v891 = vsub.s32 %v357, %v890
        %v892 = vrot.slane %v784, %v891
        %v893 = vlaneseq
        %v894 = vshrl.u32 %v893, 7
        %v895 = vsub.s32 %v357, %v894
        %v896 = vrot.slane %v787, %v895
        %v897 = vlaneseq
        %v898 = vshrl.u32 %v897, 7
        %v899 = vsub.s32 %v357, %v898
        %v900 = vrot.slane %v790, %v899
        %v901 = vlaneseq
        %v902 = vshrl.u32 %v901, 7
        %v903 = vsub.s32 %v357, %v902
        %v904 = vrot.slane %v793, %v903
        %v905 = vlaneseq
        %v906 = vshrl.u32 %v905, 7
        %v907 = vsub.s32 %v357, %v906
        %v908 = vrot.slane %v796, %v907
        %v909 = vlaneseq
        %v910 = vshrl.u32 %v909, 7
        %v911 = vsub.s32 %v357, %v910
        %v912 = vrot.slane %v799, %v911
        %v913 = vlaneseq
        %v914 = vshrl.u32 %v913, 7
        %v915 = vsub.s32 %v357, %v914
        %v916 = vrot.slane %v802, %v915
        %v917 = vlaneseq
        %v918 = vshrl.u32 %v917, 7
        %v919 = vsub.s32 %v357, %v918
        %v920 = vrot.slane %v805, %v919
        %v921 = vlaneseq
        %v922 = vshrl.u32 %v921, 7
        %v923 = vsub.s32 %v357, %v922
        %v924 = vrot.slane %v808, %v923
        %v925 = vlaneseq
        %v926 = vshrl.u32 %v925, 7
        %v927 = vsub.s32 %v357, %v926
        %v928 = vrot.slane %v811, %v927
        %v929 = vlaneseq
        %v930 = vshrl.u32 %v929, 7
        %v931 = vsub.s32 %v357, %v930
        %v932 = vrot.slane %v814, %v931
        %v933 = vlaneseq
        %v934 = vshrl.u32 %v933, 7
        %v935 = vsub.s32 %v357, %v934
        %v936 = vrot.slane %v817, %v935
        %v937 = vlaneseq
        %v938 = vshrl.u32 %v937, 7
        %v939 = vsub.s32 %v357, %v938
        %v940 = vrot.slane %v820, %v939
        %v941 = vlaneseq
        %v942 = vshrl.u32 %v941, 7
        %v943 = vsub.s32 %v357, %v942
        %v944 = vrot.slane %v823, %v943
        %v945 = vlaneseq
        %v946 = vshrl.u32 %v945, 7
        %v947 = vsub.s32 %v357, %v946
        %v948 = vrot.slane %v826, %v947
        %v949 = vlaneseq
        %v950 = vshrl.u32 %v949, 7
        %v951 = vsub.s32 %v357, %v950
        %v952 = vrot.slane %v829, %v951
        %v953 = vlaneseq
        %v954 = vshrl.u32 %v953, 7
        %v955 = vsub.s32 %v357, %v954
        %v956 = vrot.slane %v832, %v955
        %v957 = vlaneseq
        %v958 = vshrl.u32 %v957, 7
        %v959 = vsub.s32 %v357, %v958
        %v960 = vrot.slane %v835, %v959
        %v961 = vlaneseq
        %v962 = vshrl.u32 %v961, 7
        %v963 = vsub.s32 %v357, %v962
        %v964 = vrot.slane %v838, %v963
        %v965 = vlaneseq
        %v966 = vshrl.u32 %v965, 7
        %v967 = vsub.s32 %v357, %v966
        %v968 = vrot.slane %v841, %v967
        %v969 = vlaneseq
        %v970 = vshrl.u32 %v969, 7
        %v971 = vsub.s32 %v357, %v970
        %v972 = vrot.slane %v844, %v971
        %v973 = vsel %vm402, %v852, %v848
        %vm974 = vcmask 1042434
        %v975 = vsel %vm974, %v856, %v973
        %vm976 = vcmask 1043459
        %v977 = vsel %vm976, %v860, %v975
        %vm978 = vcmask 1044484
        %v979 = vsel %vm978, %v864, %v977
        %vm980 = vcmask 1045509
        %v981 = vsel %vm980, %v868, %v979
        %vm982 = vcmask 1046534
        %v983 = vsel %vm982, %v872, %v981
        %vm984 = vcmask 1047559
        %v985 = vsel %vm984, %v876, %v983
        %v986 = vsel %vm402, %v884, %v880
        %v987 = vsel %vm974, %v888, %v986
        %v988 = vsel %vm976, %v892, %v987
        %v989 = vsel %vm978, %v896, %v988
        %v990 = vsel %vm980, %v900, %v989
        %v991 = vsel %vm982, %v904, %v990
        %v992 = vsel %vm984, %v908, %v991
        %v993 = vsel %vm402, %v916, %v912
        %v994 = vsel %vm974, %v920, %v993
        %v995 = vsel %vm976, %v924, %v994
        %v996 = vsel %vm978, %v928, %v995
        %v997 = vsel %vm980, %v932, %v996
        %v998 = vsel %vm982, %v936, %v997
        %v999 = vsel %vm984, %v940, %v998
        %v1000 = vsel %vm402, %v948, %v944
        %v1001 = vsel %vm974, %v952, %v1000
        %v1002 = vsel %vm976, %v956, %v1001
        %v1003 = vsel %vm978, %v960, %v1002
        %v1004 = vsel %vm980, %v964, %v1003
        %v1005 = vsel %vm982, %v968, %v1004
        %v1006 = vsel %vm984, %v972, %v1005
        %vm1011 = vcmask 15360
        %v1012 = vsel %vm1011, %v985, 0.0
        %1013 = vadd.xlane.f32.xlu0 %v1012
        %v1014 = vpop.xlane.xlu0 %1013
        %v1015 = vsel %vm1011, %v992, 0.0
        %1016 = vadd.xlane.f32.xlu0 %v1015
        %v1017 = vpop.xlane.xlu0 %1016
        %v1018 = vsel %vm1011, %v999, 0.0
        %1019 = vadd.xlane.f32.xlu0 %v1018
        %v1020 = vpop.xlane.xlu0 %1019
        %v1021 = vsel %vm1011, %v1006, 0.0
        %1022 = vadd.xlane.f32.xlu0 %v1021
        %v1023 = vpop.xlane.xlu0 %1022
        %v1025 = vlaneseq
        %v1026 = vshrl.u32 %v1025, 7
        %v1027 = vsub.s32 0, %v1026
        %v1028 = vrot.slane %v424, %v1027
        %1030 = vbcast.lane.b32.xlu0 %v1028, 256
        %v1031 = vpop.permute.xlu0 %1030
        %s1033 = sor.u32 256, 8
        %1034 = vbcast.lane.b32.xlu0 %v1028, %s1033
        %v1035 = vpop.permute.xlu0 %1034
        %s1037 = sor.u32 256, 16
        %1038 = vbcast.lane.b32.xlu0 %v1028, %s1037
        %v1039 = vpop.permute.xlu0 %1038
        %s1041 = sor.u32 256, 24
        %1042 = vbcast.lane.b32.xlu0 %v1028, %s1041
        %v1043 = vpop.permute.xlu0 %1042
        %v1048 = vadd.f32 %v1014, %v1031
        %v1049 = vadd.f32 %v1017, %v1035
        %v1050 = vadd.f32 %v1020, %v1039
        %v1051 = vadd.f32 %v1023, %v1043
        %v1052 = vxor.u32 %v1048, 2147483648
        %v1053 = vxor.u32 %v1049, 2147483648
        %v1054 = vxor.u32 %v1050, 2147483648
        %v1055 = vxor.u32 %v1051, 2147483648
        %v1056 = vmul.f32 %v1052, 1.442695
        %v1057 = vpow.pop %v1056
        %v1058 = vmul.f32 %v1053, 1.442695
        %v1059 = vpow.pop %v1058
        %v1060 = vmul.f32 %v1054, 1.442695
        %v1061 = vpow.pop %v1060
        %v1062 = vmul.f32 %v1055, 1.442695
        %v1063 = vpow.pop %v1062
        %v1064 = vadd.f32 %v1057, 1.0
        %v1065 = vadd.f32 %v1059, 1.0
        %v1066 = vadd.f32 %v1061, 1.0
        %v1067 = vadd.f32 %v1063, 1.0
        %v1068 = vrcp.pop %v1064
        %v1069 = vmul.f32 1.0, %v1068
        %v1070 = vrcp.pop %v1065
        %v1071 = vmul.f32 1.0, %v1070
        %v1072 = vrcp.pop %v1066
        %v1073 = vmul.f32 1.0, %v1072
        %v1074 = vrcp.pop %v1067
        %v1075 = vmul.f32 1.0, %v1074
        %1077 = vset.pattern.permute.xlu0 0
        %1078 = vperm.xlu0 %1077, %v1069
        %v1079 = vpop.permute.xlu0 %1078
        %1082 = vset.pattern.permute.xlu0 0
        %1083 = vperm.xlu0 %1082, %v1071
        %v1084 = vpop.permute.xlu0 %1083
        %1087 = vset.pattern.permute.xlu0 0
        %1088 = vperm.xlu0 %1087, %v1073
        %v1089 = vpop.permute.xlu0 %1088
        %1092 = vset.pattern.permute.xlu0 0
        %1093 = vperm.xlu0 %1092, %v1075
        %v1094 = vpop.permute.xlu0 %1093
        %v1096 = vmul.f32 %v243, %v1079
        %v1097 = vmul.f32 %v244, %v1079
        %v1098 = vmul.f32 %v245, %v1084
        %v1099 = vmul.f32 %v246, %v1084
        %v1100 = vmul.f32 %v247, %v1089
        %v1101 = vmul.f32 %v248, %v1089
        %v1102 = vmul.f32 %v249, %v1094
        %v1103 = vmul.f32 %v250, %v1094
        %1104 = vst [vmem:[%s242] sm:$0xff] %v1096
        %1105 = vst [vmem:[%s242 + $0x8] sm:$0xff] %v1097
        %1106 = vst [vmem:[%s242 + $0x10] sm:$0xff] %v1098
        %1107 = vst [vmem:[%s242 + $0x18] sm:$0xff] %v1099
        %1108 = vst [vmem:[%s242 + $0x20] sm:$0xff] %v1100
        %1109 = vst [vmem:[%s242 + $0x28] sm:$0xff] %v1101
        %1110 = vst [vmem:[%s242 + $0x30] sm:$0xff] %v1102
        %1111 = vst [vmem:[%s242 + $0x38] sm:$0xff] %v1103
        %s1112 = sand.u32 %s140, 1
        %s1113 = scalar_lea.sflag [#allocation4], %s1112
        %s1114 = sand.u32 %s140, 1
        %s1115 = smul.addr %s1114, 64
        %s1116 = scalar_lea.vmem [#allocation5], %s1115
        // Predicated region
        $region45: #{tpu_custom_call.1} parent=39 // pred_check
          %p1117 = pneg %p150
        $region46: #{tpu_custom_call.1} parent=39 // pred_check_branch
          %1119 = sbr.rel (%p1117) target = $region48
        $region47: #{tpu_custom_call.1} parent=39 // pred_region
          %s1121 = ssub.s32 1024, 1024
          %1122 = vsyncadd %s1113, %s1121
          %s1123 = smul.addr %s22, 8
          %s1124 = smul.addr %s1123, 128
          %s1125 = scalar_lea.hbm %s5, %s1124
          %s1126 = sshll.u32 %s1116, 4
          %s1127 = int_to_ptr.vmem [resolvable:$true] %s1126
          %1132 = dma.vmem_to_hbm [thread:$0]  %s1127, 1024, %s1125, %s1113, 256, 256, 16
        $region48: #{tpu_custom_call.1} parent=39 // pred_fallthru
          _
      $region40: #{tpu_custom_call.1} parent=5 // pred_fallthru
        _
      %p1133 = scmp.le.s32.totalorder 2, %s17
      // Predicated region
      $region49: #{tpu_custom_call.1} parent=5 // pred_check
        %p1134 = pneg %p1133
      $region50: #{tpu_custom_call.1} parent=5 // pred_check_branch
        %1136 = sbr.rel (%p1134) target = $region52
      $region51: #{tpu_custom_call.1} parent=5 // pred_region
        %s1137 = ssub.s32 %s17, 2
        // Predicated region
        $region53: #{tpu_custom_call.1} parent=51 // pred_check
          %p1138 = pneg %p156
        $region54: #{tpu_custom_call.1} parent=51 // pred_check_branch
          %1140 = sbr.rel (%p1138) target = $region56
        $region55: #{tpu_custom_call.1} parent=51 // pred_region
          %s1141 = sand.u32 %s141, 1
          %s1142 = scalar_lea.sflag [#allocation4], %s1141
          %s1143 = sand.u32 %s141, 1
          %s1144 = smul.addr %s1143, 64
          %s1145 = scalar_lea.vmem [#allocation5], %s1144
          %1146 = dma.done %s1142, 1024
        $region56: #{tpu_custom_call.1} parent=51 // pred_fallthru
          _
      $region52: #{tpu_custom_call.1} parent=5 // pred_fallthru
        _
    $region6: #{tpu_custom_call.1} parent=1 // loop_footer
      %s21 = sadd.s32 1, %s17
    $region7: #{tpu_custom_call.1} parent=1 // loop_footer_branch
      %16 = sbr.rel target = $region3
    $region8: #{tpu_custom_call.1} parent=1 // loop_exit
      _
    %1147 = vsyncpa [#allocation3], 1
    %s1148 = scalar_lea.sflag [#allocation3], 1
    %1149 = vsyncpa %s1148, 1
    %1150 = vsyncpa [#allocation4], 1
    %s1151 = scalar_lea.sflag [#allocation4], 1
    %1152 = vsyncpa %s1151, 1

</llo_original>
